<compile_context>
chip_gen: v6e
topology: v6e:2x2x1
jax: 0.10.0
libtpu: 0.0.40
codegen_flags: <defaults>
</compile_context>

<pallas_src>
import math
from functools import partial

import jax
import jax.numpy as jnp
from jax.experimental import pallas as pl
from jax.experimental.pallas import tpu as pltpu


def tcn_gcn_kernel(x_ref, wall_ref, wtcat_ref, b_ref, out_ref):
    # x_ref:    (NB, T, V*Cin)      bf16 batch-block of inputs, channels-last
    # wall_ref: (V*Cin, 2*V*Cout)   bf16 fused x-side weight [gcn+adjacency+down | residual]
    # wtcat_ref:(5*V*Cout, V*Cout)  bf16 stacked temporal taps kron(I_V, Wt_k) (BN folded)
    # b_ref:    (2, V*Cout)         f32: row 0 gcn bias (BN+down), row 1 tcn+residual bias
    # out_ref:  (NB, T, V*Cout)     f32
    NB, T, VCi = x_ref.shape
    VCo = out_ref.shape[-1]
    KT = wtcat_ref.shape[0] // VCo
    PAD = (KT - 1) // 2
    M = NB * T

    x2 = x_ref[...].reshape(M, VCi)

    # ---- all x-side 1x1 convs as ONE matmul (gcn+adjacency+down | residual) ----
    gz = jnp.dot(x2, wall_ref[...], preferred_element_type=jnp.float32)   # (M, 2*VCo) f32
    g = jnp.maximum(gz[:, :VCo] + b_ref[0:1, :], 0.0)                     # gcn1 output (post relu)
    r = gz[:, VCo:]                                                       # outer residual branch

    # ---- unit_tcn: 5x1 temporal conv, pad=2, stride=1 --------------------------
    # Build the 5 shifted tap operands in registers with sublane rolls (XLU) and
    # zero the out-of-range rows with an iota mask, then fuse all taps into one
    # lane-concatenated operand -> a single (M, 5*VCo) @ (5*VCo, VCo) matmul.
    t_idx = jax.lax.broadcasted_iota(jnp.int32, (NB, T, VCo), 1).reshape(M, VCo)

    taps = []
    for k in range(KT):
        s = k - PAD                      # tap k reads g[t + s]
        if s == 0:
            taps.append(g)
        else:
            rolled = pltpu.roll(g, shift=(-s) % M, axis=0)   # rolled[t] = g[(t + s) % M]
            ts = t_idx + s
            valid = (ts >= 0) & (ts < T)                     # mask wrap / cross-batch rows
            taps.append(jnp.where(valid, rolled, 0.0))
    g_cat = jnp.concatenate(taps, axis=1).astype(jnp.bfloat16)            # (M, KT*VCo)

    tcn = jnp.dot(g_cat, wtcat_ref[...], preferred_element_type=jnp.float32)

    # ---- outer residual + relu -------------------------------------------------
    out = jnp.maximum(tcn + r + b_ref[1:2, :], 0.0)
    out_ref[...] = out.reshape(NB, T, VCo).astype(out_ref.dtype)


def _pick_batch_block(N, T):
    """Largest divisor of N giving ~<=256 matmul rows per grid step (fills the
    256-wide MXU on v6e/v7x), but keep >=2 grid steps when the batch allows it
    so both v7x TensorCores get work.  On single-core v5e/v6e pass
    batch_block=N explicitly to collapse to one step."""
    divs = [d for d in range(1, N + 1) if N % d == 0]
    cap = max(1, 256 // T)
    cands = [d for d in divs if d <= cap] or [1]
    nb = max(cands)
    if N // nb < 2:
        two_step = [d for d in divs if N // d >= 2]
        if two_step:
            nb = max(two_step)
    return nb


@partial(jax.jit, static_argnames=("V", "Cout", "batch_block"))
def tcn_gcn_unit_pallas(x_nchw, W_all, Wt_cat, B, *, V, Cout, batch_block=None):
    N, Cin, T, Vx = x_nchw.shape
    assert Vx == V
    VCi, VCo = V * Cin, V * Cout
    NB = batch_block if batch_block is not None else _pick_batch_block(N, T)
    assert N % NB == 0

    # NCHW -> (N, T, V*Cin) bf16 (lane-dense blocks; transpose stays inside this jit)
    x_tvc = jnp.transpose(x_nchw, (0, 2, 3, 1)).reshape(N, T, VCi).astype(jnp.bfloat16)

    out = pl.pallas_call(
        tcn_gcn_kernel,
        out_shape=jax.ShapeDtypeStruct((N, T, VCo), jnp.float32),
        grid_spec=pltpu.PrefetchScalarGridSpec(
            num_scalar_prefetch=0,
            grid=(N // NB,),
            in_specs=[
                pl.BlockSpec((NB, T, VCi), lambda n: (n, 0, 0)),
                pl.BlockSpec(W_all.shape, lambda n: (0, 0)),
                pl.BlockSpec(Wt_cat.shape, lambda n: (0, 0)),
                pl.BlockSpec(B.shape, lambda n: (0, 0)),
            ],
            out_specs=pl.BlockSpec((NB, T, VCo), lambda n: (n, 0, 0)),
        ),
        compiler_params=pltpu.CompilerParams(dimension_semantics=("parallel",)),
    )(x_tvc, W_all, Wt_cat, B)

    # (N, T, V*Cout) -> NCHW
    return jnp.transpose(out.reshape(N, T, V, Cout), (0, 3, 1, 2))


def prepare_params(A, Wg_t, bg_t, gcn_bn_gamma, gcn_bn_beta,
                   down_W, down_b, down_bn_gamma, down_bn_beta,
                   tcn_W, tcn_b, tcn_bn_gamma, tcn_bn_beta,
                   res_W, res_b, res_bn_gamma, res_bn_beta, eps=1e-5):
    """Host-side folding: BN (eval mode, fresh running stats), adjacency
    normalization and all 1x1 convs collapsed into lane-dense f32 slabs."""
    K, V, _ = A.shape
    Cout, Cin = down_W.shape
    KT = tcn_W.shape[2]

    def bn_fold(gamma, beta):
        # running_mean = 0, running_var = 1 (fresh module)
        return gamma / jnp.sqrt(1.0 + eps), beta

    s1, sh1 = bn_fold(gcn_bn_gamma, gcn_bn_beta)
    sd, shd = bn_fold(down_bn_gamma, down_bn_beta)
    st, sht = bn_fold(tcn_bn_gamma, tcn_bn_beta)
    sr, shr = bn_fold(res_bn_gamma, res_bn_beta)

    # adjacency L2 normalization (hoisted out of the kernel)
    A_norm = jnp.sqrt(jnp.sum(A * A, axis=1, keepdims=True)) + 1e-4
    An = A / A_norm

    Wg = jnp.transpose(Wg_t, (0, 2, 1))                       # (K, Cin, Cout)
    eyeV = jnp.eye(V, dtype=jnp.float32)

    # gcn: sum_s adjacency + 1x1 conv, scaled by gcn BN; plus the "down" branch (block-diag)
    W_gcn = jnp.einsum('suv,sic->uivc', An, Wg) * s1[None, None, None, :]
    Wd_f = (down_W * sd[:, None]).T                           # (Cin, Cout)
    W_gcn = W_gcn + jnp.einsum('uv,ic->uivc', eyeV, Wd_f)
    W_gcn = W_gcn.reshape(V * Cin, V * Cout)

    # outer residual 1x1 conv (+BN), block-diagonal over nodes
    Wr_f = (res_W * sr[:, None]).T                            # (Cin, Cout)
    W_res = jnp.einsum('uv,ic->uivc', eyeV, Wr_f).reshape(V * Cin, V * Cout)

    W_all = jnp.concatenate([W_gcn, W_res], axis=1)           # (V*Cin, 2*V*Cout)

    # biases: per output channel, tiled over the V nodes
    b_gcn_c = s1 * jnp.sum(bg_t, axis=0) + sh1 + (down_b * sd + shd)
    b_out_c = (tcn_b * st + sht) + (res_b * sr + shr)
    B = jnp.stack([jnp.tile(b_gcn_c, V), jnp.tile(b_out_c, V)])   # (2, V*Cout)

    # temporal taps, stacked: Wt_cat[k*VCo:(k+1)*VCo, :] = kron(I_V, tcn_W[:, :, k].T * st)
    Wt_f = jnp.transpose(tcn_W, (2, 1, 0)) * st[None, None, :]    # (KT, Cin_t, Cout_t)
    Wt_cat = jnp.einsum('uv,kio->kuivo', eyeV, Wt_f).reshape(KT * V * Cout, V * Cout)

    return W_all, Wt_cat, B


def folded_forward(x_nchw, W_all, Wt_cat, B, V, Cout, op_dtype):
    """Pure-JAX forward using the same folded slabs (mirrors the kernel math)."""
    N, Cin, T, _ = x_nchw.shape
    VCo = V * Cout
    KT = Wt_cat.shape[0] // VCo
    PAD = (KT - 1) // 2
    x2 = jnp.transpose(x_nchw, (0, 2, 3, 1)).reshape(N * T, V * Cin).astype(op_dtype)
    gz = jnp.dot(x2, W_all.astype(op_dtype), preferred_element_type=jnp.float32)
    g = jnp.maximum(gz[:, :VCo] + B[0:1, :], 0.0).reshape(N, T, VCo)
    r = gz[:, VCo:].reshape(N, T, VCo)
    gp = jnp.pad(g, ((0, 0), (PAD, PAD), (0, 0)))
    gcat = jnp.concatenate([gp[:, k:k + T, :] for k in range(KT)], axis=-1)
    tcn = jnp.dot(gcat.reshape(N * T, KT * VCo).astype(op_dtype),
                  Wt_cat.astype(op_dtype),
                  preferred_element_type=jnp.float32).reshape(N, T, VCo)
    o = jnp.maximum(tcn + r + B[1:2, :], 0.0)
    return jnp.transpose(o.reshape(N, T, V, Cout), (0, 3, 1, 2))


if __name__ == "__main__":
    # small shapes consistent with the module: x is (N, C, T, V)
    N, Cin, Cout, T, V, K = 2, 4, 8, 16, 16, 3
    KT = 5
    stride = 1  # only stride=1 supported

    key = jax.random.PRNGKey(0)
    k = jax.random.split(key, 8)

    x = jax.random.normal(k[0], (N, Cin, T, V), jnp.float32)
    A = jax.random.uniform(k[1], (K, V, V), dtype=jnp.float32)  # PA parameter

    # ---- parameter init (deterministic, mirrors the module's __init__ schemes) ----
    Wg_t = jax.random.normal(k[2], (K, Cout, Cin), jnp.float32) * math.sqrt(2.0 / (Cout * Cin * 1 * K))
    bg_t = jnp.zeros((K, Cout), jnp.float32)
    gcn_bn_gamma = jnp.full((Cout,), 1e-6, jnp.float32)   # bn_init(self.bn, 1e-6)
    gcn_bn_beta = jnp.zeros((Cout,), jnp.float32)
    down_W = jax.random.normal(k[3], (Cout, Cin), jnp.float32) * math.sqrt(2.0 / Cout)
    down_b = jnp.zeros((Cout,), jnp.float32)
    down_bn_gamma = jnp.ones((Cout,), jnp.float32)
    down_bn_beta = jnp.zeros((Cout,), jnp.float32)
    tcn_W = jax.random.normal(k[4], (Cout, Cout, KT), jnp.float32) * math.sqrt(2.0 / (Cout * KT))
    tcn_b = jnp.zeros((Cout,), jnp.float32)
    tcn_bn_gamma = jnp.ones((Cout,), jnp.float32)
    tcn_bn_beta = jnp.zeros((Cout,), jnp.float32)
    res_W = jax.random.normal(k[5], (Cout, Cin), jnp.float32) * math.sqrt(2.0 / Cout)
    res_b = jnp.zeros((Cout,), jnp.float32)
    res_bn_gamma = jnp.ones((Cout,), jnp.float32)
    res_bn_beta = jnp.zeros((Cout,), jnp.float32)

    # ---- fold everything into lane-dense slabs (plain JAX, host side) ----
    W_all, Wt_cat, B = prepare_params(
        A, Wg_t, bg_t, gcn_bn_gamma, gcn_bn_beta,
        down_W, down_b, down_bn_gamma, down_bn_beta,
        tcn_W, tcn_b, tcn_bn_gamma, tcn_bn_beta,
        res_W, res_b, res_bn_gamma, res_bn_beta)
    W_all_bf = W_all.astype(jnp.bfloat16)     # MXU is bf16-native on v5e/v6e/v7x
    Wt_cat_bf = Wt_cat.astype(jnp.bfloat16)

    # ---- run the Pallas kernel -------------------------------------------------
    out = tcn_gcn_unit_pallas(x, W_all_bf, Wt_cat_bf, B, V=V, Cout=Cout)
    out = jax.block_until_ready(out)
    assert out.shape == (N, Cout, T, V)

    # ---- check 1: kernel vs identical folded-bf16 JAX path (validates the
    #      Pallas kernel itself: roll shifts, boundary masks, tap ordering, epilogue)
    ref_bf16 = folded_forward(x, W_all_bf, Wt_cat_bf, B, V, Cout, jnp.bfloat16)
    err_kernel = float(jnp.max(jnp.abs(out - ref_bf16)))

    # ---- check 2: folded-f32 path vs exact module math (validates the host-side
    #      BN / adjacency / 1x1-conv folding, independent of bf16 rounding)
    def module_reference(xx):
        eps = 1e-5
        relu = lambda v: jnp.maximum(v, 0.0)
        s1_v, sh1_v = gcn_bn_gamma / jnp.sqrt(1.0 + eps), gcn_bn_beta
        sd_v, shd_v = down_bn_gamma / jnp.sqrt(1.0 + eps), down_bn_beta
        st_v, sht_v = tcn_bn_gamma / jnp.sqrt(1.0 + eps), tcn_bn_beta
        sr_v, shr_v = res_bn_gamma / jnp.sqrt(1.0 + eps), res_bn_beta
        A_norm = jnp.sqrt(jnp.sum(A * A, axis=1, keepdims=True)) + 1e-4
        An = A / A_norm
        xr = xx.reshape(N, Cin * T, V)
        y = jnp.zeros((N, Cout, T, V), jnp.float32)
        for s in range(K):
            xa = jnp.matmul(xr, An[s]).reshape(N, Cin, T, V)
            y = y + jnp.einsum('oc,nctv->notv', Wg_t[s], xa) + bg_t[s][None, :, None, None]
        y = y * s1_v[None, :, None, None] + sh1_v[None, :, None, None]
        d = jnp.einsum('oc,nctv->notv', down_W, xx) + down_b[None, :, None, None]
        d = d * sd_v[None, :, None, None] + shd_v[None, :, None, None]
        g = relu(y + d)
        gp = jnp.pad(g, ((0, 0), (0, 0), (2, 2), (0, 0)))
        t = jnp.zeros((N, Cout, T, V), jnp.float32)
        for kk in range(KT):
            t = t + jnp.einsum('oc,nctv->notv', tcn_W[:, :, kk], gp[:, :, kk:kk + T, :])
        t = (t + tcn_b[None, :, None, None]) * st_v[None, :, None, None] + sht_v[None, :, None, None]
        r = jnp.einsum('oc,nctv->notv', res_W, xx) + res_b[None, :, None, None]
        r = r * sr_v[None, :, None, None] + shr_v[None, :, None, None]
        return relu(t + r)

    ref_fold_f32 = folded_forward(x, W_all, Wt_cat, B, V, Cout, jnp.float32)
    ref_module = module_reference(x)
    err_fold = float(jnp.max(jnp.abs(ref_fold_f32 - ref_module)))

    if err_kernel > 2e-3:
        raise AssertionError(f"kernel vs folded-bf16 reference mismatch, max abs err = {err_kernel}")
    if err_fold > 1e-3:
        raise AssertionError(f"folded params vs module math mismatch, max abs err = {err_fold}")
    print("KERNEL_OK")
</pallas_src>

<mosaic_0001>
module attributes {stable_mosaic.version = 11 : i64} {
  func.func @tcn_gcn_kernel(%arg0: i32, %arg1: memref<1x16x64xbf16, #tpu.memory_space<vmem>>, %arg2: memref<64x256xbf16, #tpu.memory_space<vmem>>, %arg3: memref<640x128xbf16, #tpu.memory_space<vmem>>, %arg4: memref<2x128xf32, #tpu.memory_space<vmem>>, %arg5: memref<1x16x128xf32, #tpu.memory_space<vmem>>) attributes {dimension_semantics = [#tpu.dimension_semantics<parallel>], iteration_bounds = array<i64: 2>, scalar_prefetch = 0 : i64, scratch_operands = 0 : i64, tpu.core_type = #tpu.core_type<tc>, window_params = [{transform_indices = @transform_0, window_bounds = array<i64: 1, 16, 64>}, {pipeline_mode = #tpu.pipeline_mode<synchronous>, transform_indices = @transform_1, window_bounds = array<i64: 64, 256>}, {pipeline_mode = #tpu.pipeline_mode<synchronous>, transform_indices = @transform_2, window_bounds = array<i64: 640, 128>}, {pipeline_mode = #tpu.pipeline_mode<synchronous>, transform_indices = @transform_3, window_bounds = array<i64: 2, 128>}, {transform_indices = @transform_4, window_bounds = array<i64: 1, 16, 128>}]} {
    %c0 = arith.constant 0 : index
    %c0_0 = arith.constant 0 : index
    %c0_1 = arith.constant 0 : index
    %0 = vector.load %arg1[%c0, %c0_0, %c0_1] : memref<1x16x64xbf16, #tpu.memory_space<vmem>>, vector<1x16x64xbf16>
    %1 = vector.shape_cast %0 : vector<1x16x64xbf16> to vector<16x64xbf16>
    %c0_2 = arith.constant 0 : index
    %c0_3 = arith.constant 0 : index
    %2 = vector.load %arg2[%c0_2, %c0_3] : memref<64x256xbf16, #tpu.memory_space<vmem>>, vector<64x256xbf16>
    %cst = arith.constant dense<0.000000e+00> : vector<16x256xf32>
    %3 = tpu.matmul %1, %2, %cst {dimension_numbers = #tpu.dot_dimension_numbers<[1], [0], [0], [1], [0, 0, 1, 1], [], []>} : vector<16x64xbf16>, vector<64x256xbf16>, vector<16x256xf32> -> vector<16x256xf32>
    %4 = vector.extract_strided_slice %3 {offsets = [0, 0], sizes = [16, 128], strides = [1, 1]} : vector<16x256xf32> to vector<16x128xf32>
    %c0_4 = arith.constant 0 : index
    %c0_5 = arith.constant 0 : index
    %5 = vector.load %arg4[%c0_4, %c0_5] : memref<2x128xf32, #tpu.memory_space<vmem>>, vector<1x128xf32>
    %6 = vector.broadcast %5 : vector<1x128xf32> to vector<16x128xf32>
    %7 = arith.addf %4, %6 : vector<16x128xf32>
    %cst_6 = arith.constant 0.000000e+00 : f32
    %8 = vector.broadcast %cst_6 : f32 to vector<16x128xf32>
    %9 = arith.maximumf %7, %8 : vector<16x128xf32>
    %10 = vector.extract_strided_slice %3 {offsets = [0, 128], sizes = [16, 128], strides = [1, 1]} : vector<16x256xf32> to vector<16x128xf32>
    %11 = tpu.iota {dimensions = array<i32: 1>} : vector<1x16x128xi32>
    %12 = vector.shape_cast %11 : vector<1x16x128xi32> to vector<16x128xi32>
    %c2_i32 = arith.constant 2 : i32
    %13 = tpu.dynamic_rotate %9 by %c2_i32 dim 0 : vector<16x128xf32>, i32 -> vector<16x128xf32>
    %c-2_i32 = arith.constant -2 : i32
    %14 = vector.broadcast %c-2_i32 : i32 to vector<16x128xi32>
    %15 = arith.addi %12, %14 : vector<16x128xi32>
    %c0_i32 = arith.constant 0 : i32
    %16 = vector.broadcast %c0_i32 : i32 to vector<16x128xi32>
    %17 = arith.cmpi sge, %15, %16 : vector<16x128xi32>
    %c16_i32 = arith.constant 16 : i32
    %18 = vector.broadcast %c16_i32 : i32 to vector<16x128xi32>
    %19 = arith.cmpi slt, %15, %18 : vector<16x128xi32>
    %20 = arith.andi %17, %19 : vector<16x128xi1>
    %cst_7 = arith.constant 0.000000e+00 : f32
    %21 = vector.broadcast %cst_7 : f32 to vector<16x128xf32>
    %22 = arith.select %20, %13, %21 : vector<16x128xi1>, vector<16x128xf32>
    %c1_i32 = arith.constant 1 : i32
    %23 = tpu.dynamic_rotate %9 by %c1_i32 dim 0 : vector<16x128xf32>, i32 -> vector<16x128xf32>
    %c-1_i32 = arith.constant -1 : i32
    %24 = vector.broadcast %c-1_i32 : i32 to vector<16x128xi32>
    %25 = arith.addi %12, %24 : vector<16x128xi32>
    %c0_i32_8 = arith.constant 0 : i32
    %26 = vector.broadcast %c0_i32_8 : i32 to vector<16x128xi32>
    %27 = arith.cmpi sge, %25, %26 : vector<16x128xi32>
    %c16_i32_9 = arith.constant 16 : i32
    %28 = vector.broadcast %c16_i32_9 : i32 to vector<16x128xi32>
    %29 = arith.cmpi slt, %25, %28 : vector<16x128xi32>
    %30 = arith.andi %27, %29 : vector<16x128xi1>
    %cst_10 = arith.constant 0.000000e+00 : f32
    %31 = vector.broadcast %cst_10 : f32 to vector<16x128xf32>
    %32 = arith.select %30, %23, %31 : vector<16x128xi1>, vector<16x128xf32>
    %c15_i32 = arith.constant 15 : i32
    %33 = tpu.dynamic_rotate %9 by %c15_i32 dim 0 : vector<16x128xf32>, i32 -> vector<16x128xf32>
    %c1_i32_11 = arith.constant 1 : i32
    %34 = vector.broadcast %c1_i32_11 : i32 to vector<16x128xi32>
    %35 = arith.addi %12, %34 : vector<16x128xi32>
    %c0_i32_12 = arith.constant 0 : i32
    %36 = vector.broadcast %c0_i32_12 : i32 to vector<16x128xi32>
    %37 = arith.cmpi sge, %35, %36 : vector<16x128xi32>
    %c16_i32_13 = arith.constant 16 : i32
    %38 = vector.broadcast %c16_i32_13 : i32 to vector<16x128xi32>
    %39 = arith.cmpi slt, %35, %38 : vector<16x128xi32>
    %40 = arith.andi %37, %39 : vector<16x128xi1>
    %cst_14 = arith.constant 0.000000e+00 : f32
    %41 = vector.broadcast %cst_14 : f32 to vector<16x128xf32>
    %42 = arith.select %40, %33, %41 : vector<16x128xi1>, vector<16x128xf32>
    %c14_i32 = arith.constant 14 : i32
    %43 = tpu.dynamic_rotate %9 by %c14_i32 dim 0 : vector<16x128xf32>, i32 -> vector<16x128xf32>
    %c2_i32_15 = arith.constant 2 : i32
    %44 = vector.broadcast %c2_i32_15 : i32 to vector<16x128xi32>
    %45 = arith.addi %12, %44 : vector<16x128xi32>
    %c0_i32_16 = arith.constant 0 : i32
    %46 = vector.broadcast %c0_i32_16 : i32 to vector<16x128xi32>
    %47 = arith.cmpi sge, %45, %46 : vector<16x128xi32>
    %c16_i32_17 = arith.constant 16 : i32
    %48 = vector.broadcast %c16_i32_17 : i32 to vector<16x128xi32>
    %49 = arith.cmpi slt, %45, %48 : vector<16x128xi32>
    %50 = arith.andi %47, %49 : vector<16x128xi1>
    %cst_18 = arith.constant 0.000000e+00 : f32
    %51 = vector.broadcast %cst_18 : f32 to vector<16x128xf32>
    %52 = arith.select %50, %43, %51 : vector<16x128xi1>, vector<16x128xf32>
    %53 = tpu.concatenate %22, %32, %9, %42, %52 in 1 : vector<16x128xf32>, vector<16x128xf32>, vector<16x128xf32>, vector<16x128xf32>, vector<16x128xf32> -> vector<16x640xf32>
    %54 = arith.truncf %53 : vector<16x640xf32> to vector<16x640xbf16>
    %c0_19 = arith.constant 0 : index
    %c0_20 = arith.constant 0 : index
    %55 = vector.load %arg3[%c0_19, %c0_20] : memref<640x128xbf16, #tpu.memory_space<vmem>>, vector<640x128xbf16>
    %cst_21 = arith.constant dense<0.000000e+00> : vector<16x128xf32>
    %56 = tpu.matmul %54, %55, %cst_21 {dimension_numbers = #tpu.dot_dimension_numbers<[1], [0], [0], [1], [0, 0, 1, 1], [], []>} : vector<16x640xbf16>, vector<640x128xbf16>, vector<16x128xf32> -> vector<16x128xf32>
    %57 = arith.addf %56, %10 : vector<16x128xf32>
    %c1 = arith.constant 1 : index
    %c0_22 = arith.constant 0 : index
    %58 = vector.load %arg4[%c1, %c0_22] : memref<2x128xf32, #tpu.memory_space<vmem>>, vector<1x128xf32>
    %59 = vector.broadcast %58 : vector<1x128xf32> to vector<16x128xf32>
    %60 = arith.addf %57, %59 : vector<16x128xf32>
    %cst_23 = arith.constant 0.000000e+00 : f32
    %61 = vector.broadcast %cst_23 : f32 to vector<16x128xf32>
    %62 = arith.maximumf %60, %61 : vector<16x128xf32>
    %63 = vector.shape_cast %62 : vector<16x128xf32> to vector<1x16x128xf32>
    %c0_24 = arith.constant 0 : index
    %c0_25 = arith.constant 0 : index
    %c0_26 = arith.constant 0 : index
    %64 = vector.load %arg5[%c0_24, %c0_25, %c0_26] : memref<1x16x128xf32, #tpu.memory_space<vmem>>, vector<1x16x128xf32>
    tpu.vector_store %arg5[%c0_24, %c0_25, %c0_26], %63 {strides = array<i32>} : memref<1x16x128xf32, #tpu.memory_space<vmem>>, vector<1x16x128xf32>,
    return
  }
  func.func @transform_0(%arg0: i32) -> (i32, i32, i32) {
    %c0_i32 = arith.constant 0 : i32
    %c0_i32_0 = arith.constant 0 : i32
    %c0_i32_1 = arith.constant 0 : i32
    return %arg0, %c0_i32, %c0_i32_0 : i32, i32, i32
  }
  func.func @transform_1(%arg0: i32) -> (i32, i32) {
    %c0_i32 = arith.constant 0 : i32
    %c0_i32_0 = arith.constant 0 : i32
    %c0_i32_1 = arith.constant 0 : i32
    return %c0_i32, %c0_i32_0 : i32, i32
  }
  func.func @transform_2(%arg0: i32) -> (i32, i32) {
    %c0_i32 = arith.constant 0 : i32
    %c0_i32_0 = arith.constant 0 : i32
    %c0_i32_1 = arith.constant 0 : i32
    return %c0_i32, %c0_i32_0 : i32, i32
  }
  func.func @transform_3(%arg0: i32) -> (i32, i32) {
    %c0_i32 = arith.constant 0 : i32
    %c0_i32_0 = arith.constant 0 : i32
    %c0_i32_1 = arith.constant 0 : i32
    return %c0_i32, %c0_i32_0 : i32, i32
  }
  func.func @transform_4(%arg0: i32) -> (i32, i32, i32) {
    %c0_i32 = arith.constant 0 : i32
    %c0_i32_0 = arith.constant 0 : i32
    %c0_i32_1 = arith.constant 0 : i32
    return %arg0, %c0_i32, %c0_i32_0 : i32, i32, i32
  }
}

</mosaic_0001>

<llo_original>
// kernel: tcn_gcn_unit_pallas.1
$region0: #{tcn_gcn_unit_pallas.1}
  #allocation0 [shape = 'u32[]', space=smem, size = 0x4, offset = 0x4, fixed_abs, tag = 'smem constant byte address 0x4 - core index']
  #allocation1 [shape = 'u32[144,128]{1,0:T(1,128)}', space=vmem, size = 0x12000, scoped, tag = 'internal scratch']
  %s0 = inlined_call_operand.vmem [shape: bf16[2,16,64], index: 0, kind: input, shape index: {}]
  %s1 = inlined_call_operand.vmem [shape: bf16[64,256], index: 1, kind: input, shape index: {}]
  %s2 = inlined_call_operand.vmem [shape: bf16[640,128], index: 2, kind: input, shape index: {}]
  %s3 = inlined_call_operand.vmem [shape: f32[2,128], index: 3, kind: input, shape index: {}]
  %s4 = inlined_call_operand.vmem [shape: f32[2,16,128], index: 4, kind: output, shape index: {}]
  %s5 = sld [smem:[#allocation0]]
  $region49: #{tcn_gcn_unit_pallas.1} parent=0
    _
  %s7 = ssub.s32 1, %s5
  %s8 = scalar_select 0, %s7, %s5
  loop: start=0, step=1, limit=4
  $region2: #{tcn_gcn_unit_pallas.1} parent=0 // loop_pre_header
    _
  $region3: #{tcn_gcn_unit_pallas.1} parent=0 // loop_header
    %s10 = sphi 0, %s14
    %p11 = scmp.ge.s32.totalorder %s10, 4
    %s20 = sphi 0, %s22
    %s23 = sphi 0, %s20
    %s24 = sphi 0, %s23
    %s40 = sphi 0, %s24
    %s44 = sphi 0, %s44
    %s46 = sphi 0, %s44
    %s47 = sphi 0, %s46
    %s61 = sphi 0, %s47
    %s65 = sphi 0, %s65
    %s67 = sphi 0, %s65
    %s68 = sphi 0, %s67
    %s82 = sphi 0, %s68
    %s86 = sphi 0, %s86
    %s88 = sphi 0, %s86
    %s89 = sphi 0, %s88
    %s103 = sphi 0, %s89
    %s109 = sphi 0, %s111
    %s112 = sphi 0, %s109
    %s113 = sphi 0, %s112
    %s129 = sphi 0, %s113
  $region4: #{tcn_gcn_unit_pallas.1} parent=0 // loop_header_branch
    %13 = sbr.rel (%p11) target = $region8
  $region5: #{tcn_gcn_unit_pallas.1} parent=0 // loop_body
    %s15 = ssub.s32 %s10, 1
    %s16 = ssub.s32 %s10, 2
    %s17 = sadd.s32 %s10, 1
    %s18 = ssub.s32 %s10, %s17
    %p19 = scmp.eq.s32.totalorder %s18, 0
    %s21 = sadd.s32 %s20, 1
    %s22 = scalar_select %p19, %s20, %s21
    %p25 = pneg %p19
    %p26 = scmp.eq.s32.totalorder %s10, 1
    %p27 = por %p25, %p26
    %p28 = scmp.ne.s32.totalorder %s20, %s23
    %p29 = scmp.eq.s32.totalorder %s10, 0
    %p30 = por %p28, %p29
    %p31 = scmp.ne.s32.totalorder %s20, %s23
    %p32 = scmp.eq.s32.totalorder %s15, 1
    %p33 = por %p31, %p32
    %p34 = scmp.ne.s32.totalorder %s23, %s24
    %p35 = scmp.eq.s32.totalorder %s15, 0
    %p36 = por %p34, %p35
    %p37 = scmp.ne.s32.totalorder %s23, %s24
    %p38 = scmp.eq.s32.totalorder %s16, 1
    %p39 = por %p37, %p38
    %p41 = scmp.ne.s32.totalorder %s24, %s40
    %p42 = scmp.eq.s32.totalorder %s16, 0
    %p43 = por %p41, %p42
    %s45 = sadd.s32 %s44, 1
    %p48 = scmp.eq.s32.totalorder %s10, 1
    %p49 = scmp.ne.s32.totalorder %s44, %s46
    %p50 = scmp.eq.s32.totalorder %s10, 0
    %p51 = por %p49, %p50
    %p52 = scmp.ne.s32.totalorder %s44, %s46
    %p53 = scmp.eq.s32.totalorder %s15, 1
    %p54 = por %p52, %p53
    %p55 = scmp.ne.s32.totalorder %s46, %s47
    %p56 = scmp.eq.s32.totalorder %s15, 0
    %p57 = por %p55, %p56
    %p58 = scmp.ne.s32.totalorder %s46, %s47
    %p59 = scmp.eq.s32.totalorder %s16, 1
    %p60 = por %p58, %p59
    %p62 = scmp.ne.s32.totalorder %s47, %s61
    %p63 = scmp.eq.s32.totalorder %s16, 0
    %p64 = por %p62, %p63
    %s66 = sadd.s32 %s65, 1
    %p69 = scmp.eq.s32.totalorder %s10, 1
    %p70 = scmp.ne.s32.totalorder %s65, %s67
    %p71 = scmp.eq.s32.totalorder %s10, 0
    %p72 = por %p70, %p71
    %p73 = scmp.ne.s32.totalorder %s65, %s67
    %p74 = scmp.eq.s32.totalorder %s15, 1
    %p75 = por %p73, %p74
    %p76 = scmp.ne.s32.totalorder %s67, %s68
    %p77 = scmp.eq.s32.totalorder %s15, 0
    %p78 = por %p76, %p77
    %p79 = scmp.ne.s32.totalorder %s67, %s68
    %p80 = scmp.eq.s32.totalorder %s16, 1
    %p81 = por %p79, %p80
    %p83 = scmp.ne.s32.totalorder %s68, %s82
    %p84 = scmp.eq.s32.totalorder %s16, 0
    %p85 = por %p83, %p84
    %s87 = sadd.s32 %s86, 1
    %p90 = scmp.eq.s32.totalorder %s10, 1
    %p91 = scmp.ne.s32.totalorder %s86, %s88
    %p92 = scmp.eq.s32.totalorder %s10, 0
    %p93 = por %p91, %p92
    %p94 = scmp.ne.s32.totalorder %s86, %s88
    %p95 = scmp.eq.s32.totalorder %s15, 1
    %p96 = por %p94, %p95
    %p97 = scmp.ne.s32.totalorder %s88, %s89
    %p98 = scmp.eq.s32.totalorder %s15, 0
    %p99 = por %p97, %p98
    %p100 = scmp.ne.s32.totalorder %s88, %s89
    %p101 = scmp.eq.s32.totalorder %s16, 1
    %p102 = por %p100, %p101
    %p104 = scmp.ne.s32.totalorder %s89, %s103
    %p105 = scmp.eq.s32.totalorder %s16, 0
    %p106 = por %p104, %p105
    %s107 = ssub.s32 %s10, %s17
    %p108 = scmp.eq.s32.totalorder %s107, 0
    %s110 = sadd.s32 %s109, 1
    %s111 = scalar_select %p108, %s109, %s110
    %p114 = pneg %p108
    %p115 = scmp.eq.s32.totalorder %s10, 1
    %p116 = por %p114, %p115
    %p117 = scmp.ne.s32.totalorder %s109, %s112
    %p118 = scmp.eq.s32.totalorder %s10, 0
    %p119 = por %p117, %p118
    %p120 = scmp.ne.s32.totalorder %s109, %s112
    %p121 = scmp.eq.s32.totalorder %s15, 1
    %p122 = por %p120, %p121
    %p123 = scmp.ne.s32.totalorder %s112, %s113
    %p124 = scmp.eq.s32.totalorder %s15, 0
    %p125 = por %p123, %p124
    %p126 = scmp.ne.s32.totalorder %s112, %s113
    %p127 = scmp.eq.s32.totalorder %s16, 1
    %p128 = por %p126, %p127
    %p130 = scmp.ne.s32.totalorder %s113, %s129
    %p131 = scmp.eq.s32.totalorder %s16, 0
    %p132 = por %p130, %p131
    %p133 = scmp.le.s32.totalorder 1, %s10
    %p134 = scmp.lt.s32.totalorder %s10, 3
    %p135 = pnand %p133, %p134
    %p136 = pneg %p135
    // Predicated region
    $region9: #{tcn_gcn_unit_pallas.1} parent=5 // pred_check
      _
    $region10: #{tcn_gcn_unit_pallas.1} parent=5 // pred_check_branch
      %138 = sbr.rel (%p135) target = $region12
    $region11: #{tcn_gcn_unit_pallas.1} parent=5 // pred_region
      %s139 = ssub.s32 %s10, 1
      // Predicated region
      $region13: #{tcn_gcn_unit_pallas.1} parent=11 // pred_check
        %p140 = pneg %p57
      $region14: #{tcn_gcn_unit_pallas.1} parent=11 // pred_check_branch
        %142 = sbr.rel (%p140) target = $region16
      $region15: #{tcn_gcn_unit_pallas.1} parent=11 // pred_region
        _
      $region16: #{tcn_gcn_unit_pallas.1} parent=11 // pred_fallthru
        _
      // Predicated region
      $region17: #{tcn_gcn_unit_pallas.1} parent=11 // pred_check
        %p143 = pneg %p78
      $region18: #{tcn_gcn_unit_pallas.1} parent=11 // pred_check_branch
        %145 = sbr.rel (%p143) target = $region20
      $region19: #{tcn_gcn_unit_pallas.1} parent=11 // pred_region
        _
      $region20: #{tcn_gcn_unit_pallas.1} parent=11 // pred_fallthru
        _
      // Predicated region
      $region21: #{tcn_gcn_unit_pallas.1} parent=11 // pred_check
        %p146 = pneg %p99
      $region22: #{tcn_gcn_unit_pallas.1} parent=11 // pred_check_branch
        %148 = sbr.rel (%p146) target = $region24
      $region23: #{tcn_gcn_unit_pallas.1} parent=11 // pred_region
        _
      $region24: #{tcn_gcn_unit_pallas.1} parent=11 // pred_fallthru
        _
    $region12: #{tcn_gcn_unit_pallas.1} parent=5 // pred_fallthru
      _
    %p149 = scmp.lt.s32.totalorder %s10, 2
    // Predicated region
    $region25: #{tcn_gcn_unit_pallas.1} parent=5 // pred_check
      %p150 = pneg %p149
    $region26: #{tcn_gcn_unit_pallas.1} parent=5 // pred_check_branch
      %152 = sbr.rel (%p150) target = $region28
    $region27: #{tcn_gcn_unit_pallas.1} parent=5 // pred_region
      // Predicated region
      $region29: #{tcn_gcn_unit_pallas.1} parent=27 // pred_check
        %p153 = pneg %p30
      $region30: #{tcn_gcn_unit_pallas.1} parent=27 // pred_check_branch
        %155 = sbr.rel (%p153) target = $region32
      $region31: #{tcn_gcn_unit_pallas.1} parent=27 // pred_region
        %p156 = scmp.lt.s32.totalorder %s10, 1
        %s157 = scalar_select %p156, %s10, 1
        %s158 = smul.addr %s157, 2
        %s159 = smul.addr %s158, 4
        %s160 = scalar_lea.vmem %s0, %s159
      $region32: #{tcn_gcn_unit_pallas.1} parent=27 // pred_fallthru
        _
    $region28: #{tcn_gcn_unit_pallas.1} parent=5 // pred_fallthru
      _
    %p161 = scmp.le.s32.totalorder 1, %s10
    %p162 = scmp.lt.s32.totalorder %s10, 3
    %p163 = pnand %p161, %p162
    %p164 = pneg %p163
    // Predicated region
    $region33: #{tcn_gcn_unit_pallas.1} parent=5 // pred_check
      _
    $region34: #{tcn_gcn_unit_pallas.1} parent=5 // pred_check_branch
      %166 = sbr.rel (%p163) target = $region36
    $region35: #{tcn_gcn_unit_pallas.1} parent=5 // pred_region
      %s167 = ssub.s32 %s10, 1
      %p168 = scmp.lt.s32.totalorder %s15, 1
      %s169 = scalar_select %p168, %s15, 1
      %s170 = smul.addr %s169, 2
      %s171 = smul.addr %s170, 4
      %s172 = scalar_lea.vmem %s0, %s171
      %p173 = pneg %p36
      %p174 = pneg %p33
      %p175 = pneg %p57
      %p176 = pneg %p54
      %p177 = pneg %p78
      %p178 = pneg %p75
      %p179 = pneg %p99
      %p180 = pneg %p96
      %p181 = pneg %p125
      %p182 = pneg %p122
      %p183 = scmp.lt.s32.totalorder %s15, 1
      %s184 = scalar_select %p183, %s15, 1
      %s185 = smul.addr %s184, 2
      %s186 = smul.addr %s185, 8
      %s187 = scalar_lea.vmem %s4, %s186
      %p188 = scmp.lt.s32.totalorder %s15, 1
      %s189 = scalar_select %p188, %s15, 1
      %s190 = smul.addr %s189, 2
      %s191 = smul.addr %s190, 4
      %s192 = scalar_lea.vmem %s0, %s191
      %p193 = scmp.lt.s32.totalorder %s15, 1
      %s194 = scalar_select %p193, %s15, 1
      %s195 = smul.addr %s194, 2
      %s196 = smul.addr %s195, 8
      %s197 = scalar_lea.vmem %s4, %s196
      %v199 = vld [vmem:[%s192] sm:$0xf]
      %v200 = vld [vmem:[%s192 + $0x4] sm:$0xf]
      %v201 = vld [vmem:[%s1] sm:$0xff]
      %v202 = vld [vmem:[%s1 + $0x8] sm:$0xff]
      %v203 = vld [vmem:[%s1 + $0x10] sm:$0xff]
      %v204 = vld [vmem:[%s1 + $0x18] sm:$0xff]
      %v205 = vld [vmem:[%s1 + $0x20] sm:$0xff]
      %v206 = vld [vmem:[%s1 + $0x28] sm:$0xff]
      %v207 = vld [vmem:[%s1 + $0x30] sm:$0xff]
      %v208 = vld [vmem:[%s1 + $0x38] sm:$0xff]
      %v211 = vunpack.c.l.b16 %v199
      %v212 = vunpack.c.l.b16 %v200
      %v213 = vpack.c.b16 %v212, %v211
      %v222 = vunpack.c.l.b16 %v201
      %v223 = vunpack.c.h.b16 %v201
      %v224 = vunpack.c.l.b16 %v202
      %v225 = vunpack.c.h.b16 %v202
      %v226 = vunpack.c.l.b16 %v203
      %v227 = vunpack.c.h.b16 %v203
      %v228 = vunpack.c.l.b16 %v204
      %v229 = vunpack.c.h.b16 %v204
      %v230 = vunpack.c.l.b16 %v205
      %v231 = vunpack.c.h.b16 %v205
      %v232 = vunpack.c.l.b16 %v206
      %v233 = vunpack.c.h.b16 %v206
      %v234 = vunpack.c.l.b16 %v207
      %v235 = vunpack.c.h.b16 %v207
      %v236 = vunpack.c.l.b16 %v208
      %v237 = vunpack.c.h.b16 %v208
      %v238 = vpack.c.b16 %v224, %v222
      %v239 = vpack.c.b16 %v225, %v223
      %v240 = vpack.c.b16 %v228, %v226
      %v241 = vpack.c.b16 %v229, %v227
      %v242 = vpack.c.b16 %v232, %v230
      %v243 = vpack.c.b16 %v233, %v231
      %v244 = vpack.c.b16 %v236, %v234
      %v245 = vpack.c.b16 %v237, %v235
      %vm254 = vcmask 523264
      %v256 = vsel %vm254, %v213, 0
      %258 = vmatprep.subr.bf16.mxu0 0
      %259 = vmatpush1.bf16.msra.mxu0 0
      %260 = vmatprep.subr.bf16.mxu0 0
      %261 = vmatpush1.bf16.msra.mxu0 0
      %262 = vmatprep.subr.bf16.mxu0 0
      %263 = vmatpush1.bf16.msra.mxu0 0
      %264 = vmatprep.subr.bf16.mxu0 0
      %265 = vmatpush1.bf16.msra.mxu0 0
      %266 = vmatprep.subr.bf16.mxu0 %v245
      %267 = vmatpush1.bf16.msra.mxu0 %v244
      %268 = vmatprep.subr.bf16.mxu0 %v243
      %269 = vmatpush1.bf16.msra.mxu0 %v242
      %270 = vmatprep.subr.bf16.mxu0 %v241
      %271 = vmatpush1.bf16.msra.mxu0 %v240
      %272 = vmatprep.subr.bf16.mxu0 %v239
      %273 = vmatpush1.bf16.msra.mxu0 %v238
      %274 = vmatprep.subr.bf16.mxu0 0
      %275 = vmatpush2.bf16.msra.mxu0 0
      %276 = vmatprep.subr.bf16.mxu0 0
      %277 = vmatpush2.bf16.msra.mxu0 0
      %278 = vmatprep.subr.bf16.mxu0 0
      %279 = vmatpush2.bf16.msra.mxu0 0
      %280 = vmatprep.subr.bf16.mxu0 0
      %281 = vmatpush2.bf16.msra.mxu0 0
      %282 = vmatprep.subr.bf16.mxu0 0
      %283 = vmatpush2.bf16.msra.mxu0 0
      %284 = vmatprep.subr.bf16.mxu0 0
      %285 = vmatpush2.bf16.msra.mxu0 0
      %286 = vmatprep.subr.bf16.mxu0 0
      %287 = vmatpush2.bf16.msra.mxu0 0
      %288 = vmatprep.subr.bf16.mxu0 0
      %289 = vmatpush2.bf16.msra.mxu0 0
      %290 = vmatprep.mubr.bf16.mxu0 0
      %291 = vmatmul.mubr.bf16.gmra.mxu0 %v256
      %v292 = vpop.f32.mrf.mxu0
      %v293 = vadd.f32 0.0, %v292
      %v294 = vpop.f32.mrf.mxu0
      %v295 = vadd.f32 0.0, %v294
      %v296 = vpop.f32.mrf.mxu0
      %v297 = vadd.f32 0.0, %v296
      %v298 = vpop.f32.mrf.mxu0
      %v299 = vadd.f32 0.0, %v298
      %300 = vdwg.mxu0
      %v301 = vld [vmem:[%s3] sm:$0x1]
      %v302 = vlaneseq
      %v303 = vshrl.u32 %v302, 7
      %v304 = vsub.s32 0, %v303
      %v305 = vrot.slane %v301, %v304
      %v306 = vadd.f32 %v293, %v305
      %v307 = vadd.f32 %v297, %v305
      %v308 = vmax.f32 %v306, 0.0
      %v309 = vmax.f32 %v307, 0.0
      %v310 = vlaneseq
      %v311 = vshrl.u32 %v310, 7
      %v312 = vadd.s32 %v311, 8
      %v313 = vrot.slane %v308, 6
      %v314 = vrot.slane %v309, 6
      %vm315 = vcmp.lt.s32.totalorder %v311, 2
      %v316 = vsel %vm315, %v313, %v314
      %v317 = vsel %vm315, %v314, %v313
      %v318 = vadd.s32 %v311, 4294967294
      %v319 = vadd.s32 %v312, 4294967294
      %vm320 = vcmp.ge.s32.totalorder %v318, 0
      %vm321 = vcmp.ge.s32.totalorder %v319, 0
      %vm322 = vcmp.lt.s32.totalorder %v318, 16
      %vm323 = vcmp.lt.s32.totalorder %v319, 16
      %vm324 = vmand %vm320, %vm322
      %vm325 = vmand %vm321, %vm323
      %v326 = vsel %vm324, %v317, 0.0
      %v327 = vsel %vm325, %v316, 0.0
      %v328 = vrot.slane %v308, 7
      %v329 = vrot.slane %v309, 7
      %vm330 = vcmp.lt.s32.totalorder %v311, 1
      %v331 = vsel %vm330, %v328, %v329
      %v332 = vsel %vm330, %v329, %v328
      %v333 = vadd.s32 %v311, 4294967295
      %v334 = vadd.s32 %v312, 4294967295
      %vm335 = vcmp.ge.s32.totalorder %v333, 0
      %vm336 = vcmp.ge.s32.totalorder %v334, 0
      %vm337 = vcmp.lt.s32.totalorder %v333, 16
      %vm338 = vcmp.lt.s32.totalorder %v334, 16
      %vm339 = vmand %vm335, %vm337
      %vm340 = vmand %vm336, %vm338
      %v341 = vsel %vm339, %v332, 0.0
      %v342 = vsel %vm340, %v331, 0.0
      %v343 = vrot.slane %v308, 1
      %v344 = vrot.slane %v309, 1
      %vm345 = vcmp.lt.s32.totalorder %v311, 7
      %v346 = vsel %vm345, %v343, %v344
      %v347 = vsel %vm345, %v344, %v343
      %v348 = vadd.s32 %v311, 1
      %v349 = vadd.s32 %v312, 1
      %vm350 = vcmp.ge.s32.totalorder %v348, 0
      %vm351 = vcmp.ge.s32.totalorder %v349, 0
      %vm352 = vcmp.lt.s32.totalorder %v348, 16
      %vm353 = vcmp.lt.s32.totalorder %v349, 16
      %vm354 = vmand %vm350, %vm352
      %vm355 = vmand %vm351, %vm353
      %v356 = vsel %vm354, %v346, 0.0
      %v357 = vsel %vm355, %v347, 0.0
      %v358 = vrot.slane %v308, 2
      %v359 = vrot.slane %v309, 2
      %vm360 = vcmp.lt.s32.totalorder %v311, 6
      %v361 = vsel %vm360, %v358, %v359
      %v362 = vsel %vm360, %v359, %v358
      %v363 = vadd.s32 %v311, 2
      %v364 = vadd.s32 %v312, 2
      %vm365 = vcmp.ge.s32.totalorder %v363, 0
      %vm366 = vcmp.ge.s32.totalorder %v364, 0
      %vm367 = vcmp.lt.s32.totalorder %v363, 16
      %vm368 = vcmp.lt.s32.totalorder %v364, 16
      %vm369 = vmand %vm365, %vm367
      %vm370 = vmand %vm366, %vm368
      %v371 = vsel %vm369, %v361, 0.0
      %v372 = vsel %vm370, %v362, 0.0
      %v373 = vpack.c.bf16 %v327, %v326
      %v374 = vpack.c.bf16 %v342, %v341
      %v375 = vpack.c.bf16 %v309, %v308
      %v376 = vpack.c.bf16 %v357, %v356
      %v377 = vpack.c.bf16 %v372, %v371
      %v378 = vld [vmem:[%s2] sm:$0xf]
      %v379 = vld [vmem:[%s2 + $0x4] sm:$0xf]
      %v380 = vld [vmem:[%s2 + $0x8] sm:$0xf]
      %v381 = vld [vmem:[%s2 + $0xc] sm:$0xf]
      %v382 = vld [vmem:[%s2 + $0x10] sm:$0xf]
      %v383 = vld [vmem:[%s2 + $0x14] sm:$0xf]
      %v384 = vld [vmem:[%s2 + $0x18] sm:$0xf]
      %v385 = vld [vmem:[%s2 + $0x1c] sm:$0xf]
      %v386 = vld [vmem:[%s2 + $0x20] sm:$0xf]
      %v387 = vld [vmem:[%s2 + $0x24] sm:$0xf]
      %v388 = vld [vmem:[%s2 + $0x28] sm:$0xf]
      %v389 = vld [vmem:[%s2 + $0x2c] sm:$0xf]
      %v390 = vld [vmem:[%s2 + $0x30] sm:$0xf]
      %v391 = vld [vmem:[%s2 + $0x34] sm:$0xf]
      %v392 = vld [vmem:[%s2 + $0x38] sm:$0xf]
      %v393 = vld [vmem:[%s2 + $0x3c] sm:$0xf]
      %v394 = vld [vmem:[%s2 + $0x40] sm:$0xf]
      %v395 = vld [vmem:[%s2 + $0x44] sm:$0xf]
      %v396 = vld [vmem:[%s2 + $0x48] sm:$0xf]
      %v397 = vld [vmem:[%s2 + $0x4c] sm:$0xf]
      %v398 = vld [vmem:[%s2 + $0x50] sm:$0xf]
      %v399 = vld [vmem:[%s2 + $0x54] sm:$0xf]
      %v400 = vld [vmem:[%s2 + $0x58] sm:$0xf]
      %v401 = vld [vmem:[%s2 + $0x5c] sm:$0xf]
      %v402 = vld [vmem:[%s2 + $0x60] sm:$0xf]
      %v403 = vld [vmem:[%s2 + $0x64] sm:$0xf]
      %v404 = vld [vmem:[%s2 + $0x68] sm:$0xf]
      %v405 = vld [vmem:[%s2 + $0x6c] sm:$0xf]
      %v406 = vld [vmem:[%s2 + $0x70] sm:$0xf]
      %v407 = vld [vmem:[%s2 + $0x74] sm:$0xf]
      %v408 = vld [vmem:[%s2 + $0x78] sm:$0xf]
      %v409 = vld [vmem:[%s2 + $0x7c] sm:$0xf]
      %v410 = vld [vmem:[%s2 + $0x80] sm:$0xf]
      %v411 = vld [vmem:[%s2 + $0x84] sm:$0xf]
      %v412 = vld [vmem:[%s2 + $0x88] sm:$0xf]
      %v413 = vld [vmem:[%s2 + $0x8c] sm:$0xf]
      %v414 = vld [vmem:[%s2 + $0x90] sm:$0xf]
      %v415 = vld [vmem:[%s2 + $0x94] sm:$0xf]
      %v416 = vld [vmem:[%s2 + $0x98] sm:$0xf]
      %v417 = vld [vmem:[%s2 + $0x9c] sm:$0xf]
      %v418 = vld [vmem:[%s2 + $0xa0] sm:$0xf]
      %v419 = vld [vmem:[%s2 + $0xa4] sm:$0xf]
      %v420 = vld [vmem:[%s2 + $0xa8] sm:$0xf]
      %v421 = vld [vmem:[%s2 + $0xac] sm:$0xf]
      %v422 = vld [vmem:[%s2 + $0xb0] sm:$0xf]
      %v423 = vld [vmem:[%s2 + $0xb4] sm:$0xf]
      %v424 = vld [vmem:[%s2 + $0xb8] sm:$0xf]
      %v425 = vld [vmem:[%s2 + $0xbc] sm:$0xf]
      %v426 = vld [vmem:[%s2 + $0xc0] sm:$0xf]
      %v427 = vld [vmem:[%s2 + $0xc4] sm:$0xf]
      %v428 = vld [vmem:[%s2 + $0xc8] sm:$0xf]
      %v429 = vld [vmem:[%s2 + $0xcc] sm:$0xf]
      %v430 = vld [vmem:[%s2 + $0xd0] sm:$0xf]
      %v431 = vld [vmem:[%s2 + $0xd4] sm:$0xf]
      %v432 = vld [vmem:[%s2 + $0xd8] sm:$0xf]
      %v433 = vld [vmem:[%s2 + $0xdc] sm:$0xf]
      %v434 = vld [vmem:[%s2 + $0xe0] sm:$0xf]
      %v435 = vld [vmem:[%s2 + $0xe4] sm:$0xf]
      %v436 = vld [vmem:[%s2 + $0xe8] sm:$0xf]
      %v437 = vld [vmem:[%s2 + $0xec] sm:$0xf]
      %v438 = vld [vmem:[%s2 + $0xf0] sm:$0xf]
      %v439 = vld [vmem:[%s2 + $0xf4] sm:$0xf]
      %v440 = vld [vmem:[%s2 + $0xf8] sm:$0xf]
      %v441 = vld [vmem:[%s2 + $0xfc] sm:$0xf]
      %v442 = vld [vmem:[%s2 + $0x100] sm:$0xf]
      %v443 = vld [vmem:[%s2 + $0x104] sm:$0xf]
      %v444 = vld [vmem:[%s2 + $0x108] sm:$0xf]
      %v445 = vld [vmem:[%s2 + $0x10c] sm:$0xf]
      %v446 = vld [vmem:[%s2 + $0x110] sm:$0xf]
      %v447 = vld [vmem:[%s2 + $0x114] sm:$0xf]
      %v448 = vld [vmem:[%s2 + $0x118] sm:$0xf]
      %v449 = vld [vmem:[%s2 + $0x11c] sm:$0xf]
      %v450 = vld [vmem:[%s2 + $0x120] sm:$0xf]
      %v451 = vld [vmem:[%s2 + $0x124] sm:$0xf]
      %v452 = vld [vmem:[%s2 + $0x128] sm:$0xf]
      %v453 = vld [vmem:[%s2 + $0x12c] sm:$0xf]
      %v454 = vld [vmem:[%s2 + $0x130] sm:$0xf]
      %v455 = vld [vmem:[%s2 + $0x134] sm:$0xf]
      %v456 = vld [vmem:[%s2 + $0x138] sm:$0xf]
      %v457 = vld [vmem:[%s2 + $0x13c] sm:$0xf]
      %v538 = vunpack.c.l.b16 %v378
      %v539 = vunpack.c.l.b16 %v379
      %v540 = vunpack.c.l.b16 %v380
      %v541 = vunpack.c.l.b16 %v381
      %v542 = vunpack.c.l.b16 %v382
      %v543 = vunpack.c.l.b16 %v383
      %v544 = vunpack.c.l.b16 %v384
      %v545 = vunpack.c.l.b16 %v385
      %v546 = vunpack.c.l.b16 %v386
      %v547 = vunpack.c.l.b16 %v387
      %v548 = vunpack.c.l.b16 %v388
      %v549 = vunpack.c.l.b16 %v389
      %v550 = vunpack.c.l.b16 %v390
      %v551 = vunpack.c.l.b16 %v391
      %v552 = vunpack.c.l.b16 %v392
      %v553 = vunpack.c.l.b16 %v393
      %v554 = vunpack.c.l.b16 %v394
      %v555 = vunpack.c.l.b16 %v395
      %v556 = vunpack.c.l.b16 %v396
      %v557 = vunpack.c.l.b16 %v397
      %v558 = vunpack.c.l.b16 %v398
      %v559 = vunpack.c.l.b16 %v399
      %v560 = vunpack.c.l.b16 %v400
      %v561 = vunpack.c.l.b16 %v401
      %v562 = vunpack.c.l.b16 %v402
      %v563 = vunpack.c.l.b16 %v403
      %v564 = vunpack.c.l.b16 %v404
      %v565 = vunpack.c.l.b16 %v405
      %v566 = vunpack.c.l.b16 %v406
      %v567 = vunpack.c.l.b16 %v407
      %v568 = vunpack.c.l.b16 %v408
      %v569 = vunpack.c.l.b16 %v409
      %v570 = vunpack.c.l.b16 %v410
      %v571 = vunpack.c.l.b16 %v411
      %v572 = vunpack.c.l.b16 %v412
      %v573 = vunpack.c.l.b16 %v413
      %v574 = vunpack.c.l.b16 %v414
      %v575 = vunpack.c.l.b16 %v415
      %v576 = vunpack.c.l.b16 %v416
      %v577 = vunpack.c.l.b16 %v417
      %v578 = vunpack.c.l.b16 %v418
      %v579 = vunpack.c.l.b16 %v419
      %v580 = vunpack.c.l.b16 %v420
      %v581 = vunpack.c.l.b16 %v421
      %v582 = vunpack.c.l.b16 %v422
      %v583 = vunpack.c.l.b16 %v423
      %v584 = vunpack.c.l.b16 %v424
      %v585 = vunpack.c.l.b16 %v425
      %v586 = vunpack.c.l.b16 %v426
      %v587 = vunpack.c.l.b16 %v427
      %v588 = vunpack.c.l.b16 %v428
      %v589 = vunpack.c.l.b16 %v429
      %v590 = vunpack.c.l.b16 %v430
      %v591 = vunpack.c.l.b16 %v431
      %v592 = vunpack.c.l.b16 %v432
      %v593 = vunpack.c.l.b16 %v433
      %v594 = vunpack.c.l.b16 %v434
      %v595 = vunpack.c.l.b16 %v435
      %v596 = vunpack.c.l.b16 %v436
      %v597 = vunpack.c.l.b16 %v437
      %v598 = vunpack.c.l.b16 %v438
      %v599 = vunpack.c.l.b16 %v439
      %v600 = vunpack.c.l.b16 %v440
      %v601 = vunpack.c.l.b16 %v441
      %v602 = vunpack.c.l.b16 %v442
      %v603 = vunpack.c.l.b16 %v443
      %v604 = vunpack.c.l.b16 %v444
      %v605 = vunpack.c.l.b16 %v445
      %v606 = vunpack.c.l.b16 %v446
      %v607 = vunpack.c.l.b16 %v447
      %v608 = vunpack.c.l.b16 %v448
      %v609 = vunpack.c.l.b16 %v449
      %v610 = vunpack.c.l.b16 %v450
      %v611 = vunpack.c.l.b16 %v451
      %v612 = vunpack.c.l.b16 %v452
      %v613 = vunpack.c.l.b16 %v453
      %v614 = vunpack.c.l.b16 %v454
      %v615 = vunpack.c.l.b16 %v455
      %v616 = vunpack.c.l.b16 %v456
      %v617 = vunpack.c.l.b16 %v457
      %v618 = vpack.c.b16 %v539, %v538
      %v619 = vpack.c.b16 %v541, %v540
      %v620 = vpack.c.b16 %v543, %v542
      %v621 = vpack.c.b16 %v545, %v544
      %v622 = vpack.c.b16 %v547, %v546
      %v623 = vpack.c.b16 %v549, %v548
      %v624 = vpack.c.b16 %v551, %v550
      %v625 = vpack.c.b16 %v553, %v552
      %v626 = vpack.c.b16 %v555, %v554
      %v627 = vpack.c.b16 %v557, %v556
      %v628 = vpack.c.b16 %v559, %v558
      %v629 = vpack.c.b16 %v561, %v560
      %v630 = vpack.c.b16 %v563, %v562
      %v631 = vpack.c.b16 %v565, %v564
      %v632 = vpack.c.b16 %v567, %v566
      %v633 = vpack.c.b16 %v569, %v568
      %v634 = vpack.c.b16 %v571, %v570
      %v635 = vpack.c.b16 %v573, %v572
      %v636 = vpack.c.b16 %v575, %v574
      %v637 = vpack.c.b16 %v577, %v576
      %v638 = vpack.c.b16 %v579, %v578
      %v639 = vpack.c.b16 %v581, %v580
      %v640 = vpack.c.b16 %v583, %v582
      %v641 = vpack.c.b16 %v585, %v584
      %v642 = vpack.c.b16 %v587, %v586
      %v643 = vpack.c.b16 %v589, %v588
      %v644 = vpack.c.b16 %v591, %v590
      %v645 = vpack.c.b16 %v593, %v592
      %v646 = vpack.c.b16 %v595, %v594
      %v647 = vpack.c.b16 %v597, %v596
      %v648 = vpack.c.b16 %v599, %v598
      %v649 = vpack.c.b16 %v601, %v600
      %v650 = vpack.c.b16 %v603, %v602
      %v651 = vpack.c.b16 %v605, %v604
      %v652 = vpack.c.b16 %v607, %v606
      %v653 = vpack.c.b16 %v609, %v608
      %v654 = vpack.c.b16 %v611, %v610
      %v655 = vpack.c.b16 %v613, %v612
      %v656 = vpack.c.b16 %v615, %v614
      %v657 = vpack.c.b16 %v617, %v616
      %698 = vmatprep.subr.bf16.mxu0 0
      %699 = vmatpush1.bf16.msra.mxu0 %v625
      %700 = vmatprep.subr.bf16.mxu0 0
      %701 = vmatpush1.bf16.msra.mxu0 %v624
      %702 = vmatprep.subr.bf16.mxu0 0
      %703 = vmatpush1.bf16.msra.mxu0 %v623
      %704 = vmatprep.subr.bf16.mxu0 0
      %705 = vmatpush1.bf16.msra.mxu0 %v622
      %706 = vmatprep.subr.bf16.mxu0 0
      %707 = vmatpush1.bf16.msra.mxu0 %v621
      %708 = vmatprep.subr.bf16.mxu0 0
      %709 = vmatpush1.bf16.msra.mxu0 %v620
      %710 = vmatprep.subr.bf16.mxu0 0
      %711 = vmatpush1.bf16.msra.mxu0 %v619
      %712 = vmatprep.subr.bf16.mxu0 0
      %713 = vmatpush1.bf16.msra.mxu0 %v618
      %714 = vmatprep.subr.bf16.mxu0 0
      %715 = vmatpush2.bf16.msra.mxu0 %v633
      %716 = vmatprep.subr.bf16.mxu0 0
      %717 = vmatpush2.bf16.msra.mxu0 %v632
      %718 = vmatprep.subr.bf16.mxu0 0
      %719 = vmatpush2.bf16.msra.mxu0 %v631
      %720 = vmatprep.subr.bf16.mxu0 0
      %721 = vmatpush2.bf16.msra.mxu0 %v630
      %722 = vmatprep.subr.bf16.mxu0 0
      %723 = vmatpush2.bf16.msra.mxu0 %v629
      %724 = vmatprep.subr.bf16.mxu0 0
      %725 = vmatpush2.bf16.msra.mxu0 %v628
      %726 = vmatprep.subr.bf16.mxu0 0
      %727 = vmatpush2.bf16.msra.mxu0 %v627
      %728 = vmatprep.subr.bf16.mxu0 0
      %729 = vmatpush2.bf16.msra.mxu0 %v626
      %730 = vmatprep.mubr.bf16.mxu0 %v374
      %731 = vmatmul.mubr.bf16.gmra.mxu0 %v373
      %v732 = vpop.f32.mrf.mxu0
      %v733 = vadd.f32 %v295, %v732
      %v734 = vpop.f32.mrf.mxu0
      %v735 = vpop.f32.mrf.mxu0
      %v736 = vadd.f32 %v299, %v735
      %v737 = vpop.f32.mrf.mxu0
      %738 = vdwg.mxu0
      %739 = vmatprep.subr.bf16.mxu0 0
      %740 = vmatpush1.bf16.msra.mxu0 %v641
      %741 = vmatprep.subr.bf16.mxu0 0
      %742 = vmatpush1.bf16.msra.mxu0 %v640
      %743 = vmatprep.subr.bf16.mxu0 0
      %744 = vmatpush1.bf16.msra.mxu0 %v639
      %745 = vmatprep.subr.bf16.mxu0 0
      %746 = vmatpush1.bf16.msra.mxu0 %v638
      %747 = vmatprep.subr.bf16.mxu0 0
      %748 = vmatpush1.bf16.msra.mxu0 %v637
      %749 = vmatprep.subr.bf16.mxu0 0
      %750 = vmatpush1.bf16.msra.mxu0 %v636
      %751 = vmatprep.subr.bf16.mxu0 0
      %752 = vmatpush1.bf16.msra.mxu0 %v635
      %753 = vmatprep.subr.bf16.mxu0 0
      %754 = vmatpush1.bf16.msra.mxu0 %v634
      %755 = vmatprep.subr.bf16.mxu0 0
      %756 = vmatpush2.bf16.msra.mxu0 %v649
      %757 = vmatprep.subr.bf16.mxu0 0
      %758 = vmatpush2.bf16.msra.mxu0 %v648
      %759 = vmatprep.subr.bf16.mxu0 0
      %760 = vmatpush2.bf16.msra.mxu0 %v647
      %761 = vmatprep.subr.bf16.mxu0 0
      %762 = vmatpush2.bf16.msra.mxu0 %v646
      %763 = vmatprep.subr.bf16.mxu0 0
      %764 = vmatpush2.bf16.msra.mxu0 %v645
      %765 = vmatprep.subr.bf16.mxu0 0
      %766 = vmatpush2.bf16.msra.mxu0 %v644
      %767 = vmatprep.subr.bf16.mxu0 0
      %768 = vmatpush2.bf16.msra.mxu0 %v643
      %769 = vmatprep.subr.bf16.mxu0 0
      %770 = vmatpush2.bf16.msra.mxu0 %v642
      %771 = vmatprep.mubr.bf16.mxu0 %v376
      %772 = vmatmul.mubr.bf16.gmra.mxu0 %v375
      %v773 = vpop.f32.mrf.mxu0
      %v774 = vadd.f32 %v733, %v773
      %v775 = vpop.f32.mrf.mxu0
      %v776 = vpop.f32.mrf.mxu0
      %v777 = vadd.f32 %v736, %v776
      %v778 = vpop.f32.mrf.mxu0
      %779 = vdwg.mxu0
      %780 = vmatprep.subr.bf16.mxu0 0
      %781 = vmatpush1.bf16.msra.mxu0 %v657
      %782 = vmatprep.subr.bf16.mxu0 0
      %783 = vmatpush1.bf16.msra.mxu0 %v656
      %784 = vmatprep.subr.bf16.mxu0 0
      %785 = vmatpush1.bf16.msra.mxu0 %v655
      %786 = vmatprep.subr.bf16.mxu0 0
      %787 = vmatpush1.bf16.msra.mxu0 %v654
      %788 = vmatprep.subr.bf16.mxu0 0
      %789 = vmatpush1.bf16.msra.mxu0 %v653
      %790 = vmatprep.subr.bf16.mxu0 0
      %791 = vmatpush1.bf16.msra.mxu0 %v652
      %792 = vmatprep.subr.bf16.mxu0 0
      %793 = vmatpush1.bf16.msra.mxu0 %v651
      %794 = vmatprep.subr.bf16.mxu0 0
      %795 = vmatpush1.bf16.msra.mxu0 %v650
      %796 = vmatprep.subr.bf16.mxu0 0
      %797 = vmatpush2.bf16.msra.mxu0 0
      %798 = vmatprep.subr.bf16.mxu0 0
      %799 = vmatpush2.bf16.msra.mxu0 0
      %800 = vmatprep.subr.bf16.mxu0 0
      %801 = vmatpush2.bf16.msra.mxu0 0
      %802 = vmatprep.subr.bf16.mxu0 0
      %803 = vmatpush2.bf16.msra.mxu0 0
      %804 = vmatprep.subr.bf16.mxu0 0
      %805 = vmatpush2.bf16.msra.mxu0 0
      %806 = vmatprep.subr.bf16.mxu0 0
      %807 = vmatpush2.bf16.msra.mxu0 0
      %808 = vmatprep.subr.bf16.mxu0 0
      %809 = vmatpush2.bf16.msra.mxu0 0
      %810 = vmatprep.subr.bf16.mxu0 0
      %811 = vmatpush2.bf16.msra.mxu0 0
      %812 = vmatprep.mubr.bf16.mxu0 0
      %813 = vmatmul.mubr.bf16.gmra.mxu0 %v377
      %v814 = vpop.f32.mrf.mxu0
      %v815 = vadd.f32 %v774, %v814
      %v816 = vpop.f32.mrf.mxu0
      %v817 = vpop.f32.mrf.mxu0
      %v818 = vadd.f32 %v777, %v817
      %v819 = vpop.f32.mrf.mxu0
      %820 = vdwg.mxu0
      %v821 = vld [vmem:[%s3 + $0x1] sm:$0x1]
      %v822 = vlaneseq
      %v823 = vshrl.u32 %v822, 7
      %v824 = vsub.s32 0, %v823
      %v825 = vrot.slane %v821, %v824
      %v826 = vadd.f32 %v815, %v825
      %v827 = vadd.f32 %v818, %v825
      %v828 = vmax.f32 %v826, 0.0
      %v829 = vmax.f32 %v827, 0.0
      %830 = vst [vmem:[%s197] sm:$0xff] %v828
      %831 = vst [vmem:[%s197 + $0x8] sm:$0xff] %v829
      %p832 = scmp.lt.s32.totalorder %s15, 1
      %s833 = scalar_select %p832, %s15, 1
      %s834 = smul.addr %s833, 2
      %s835 = smul.addr %s834, 8
      %s836 = scalar_lea.vmem %s4, %s835
      // Predicated region
      $region37: #{tcn_gcn_unit_pallas.1} parent=35 // pred_check
        %p837 = pneg %p122
      $region38: #{tcn_gcn_unit_pallas.1} parent=35 // pred_check_branch
        %839 = sbr.rel (%p837) target = $region40
      $region39: #{tcn_gcn_unit_pallas.1} parent=35 // pred_region
        _
      $region40: #{tcn_gcn_unit_pallas.1} parent=35 // pred_fallthru
        _
    $region36: #{tcn_gcn_unit_pallas.1} parent=5 // pred_fallthru
      _
    %p840 = scmp.le.s32.totalorder 2, %s10
    // Predicated region
    $region41: #{tcn_gcn_unit_pallas.1} parent=5 // pred_check
      %p841 = pneg %p840
    $region42: #{tcn_gcn_unit_pallas.1} parent=5 // pred_check_branch
      %843 = sbr.rel (%p841) target = $region44
    $region43: #{tcn_gcn_unit_pallas.1} parent=5 // pred_region
      %s844 = ssub.s32 %s10, 2
      // Predicated region
      $region45: #{tcn_gcn_unit_pallas.1} parent=43 // pred_check
        %p845 = pneg %p128
      $region46: #{tcn_gcn_unit_pallas.1} parent=43 // pred_check_branch
        %847 = sbr.rel (%p845) target = $region48
      $region47: #{tcn_gcn_unit_pallas.1} parent=43 // pred_region
        %p848 = scmp.lt.s32.totalorder %s16, 1
        %s849 = scalar_select %p848, %s16, 1
        %s850 = smul.addr %s849, 2
        %s851 = smul.addr %s850, 8
        %s852 = scalar_lea.vmem %s4, %s851
      $region48: #{tcn_gcn_unit_pallas.1} parent=43 // pred_fallthru
        _
    $region44: #{tcn_gcn_unit_pallas.1} parent=5 // pred_fallthru
      _
  $region6: #{tcn_gcn_unit_pallas.1} parent=0 // loop_footer
    %s14 = sadd.s32 1, %s10
  $region7: #{tcn_gcn_unit_pallas.1} parent=0 // loop_footer_branch
    %9 = sbr.rel target = $region3
  $region8: #{tcn_gcn_unit_pallas.1} parent=0 // loop_exit
    _

</llo_original>
